<compile_context>
chip_gen: v5e
topology: v5e:2x2
jax: 0.10.0
libtpu: 0.0.40
codegen_flags: <defaults>
</compile_context>

<pallas_src>
import jax
import jax.numpy as jnp
from jax import lax
from jax.experimental import pallas as pl
from jax.experimental.pallas import tpu as pltpu

# ----- model hyper-params (small, consistent with the module constructor) -----
D_MODEL = 32
NHEAD = 4
HEAD_DIM = D_MODEL // NHEAD
DIM_FF = 64
SEQ = 8
BATCH = 2
LN_EPS = 1e-5
LEAKY_SLOPE = 0.01       # F.leaky_relu default negative_slope


def _layer_norm(x, gamma, beta):
    mean = jnp.mean(x, axis=-1, keepdims=True)
    var = jnp.mean((x - mean) ** 2, axis=-1, keepdims=True)
    return (x - mean) * lax.rsqrt(var + LN_EPS) * gamma + beta


def encoder_layer_kernel(x_ref, pos_ref,
                         wqk_ref, wv_ref, wo_ref, w1_ref, w2_ref,
                         cd_ref, cw_ref,
                         out_ref):
    """Per-grid-step shapes (one batch element per step):
      x/pos : (1, S, D)
      wqk   : (D, 2D)   [Wq*scale | Wk]     wv : (D, D)    wo : (D, D)
      w1    : (D, F)    w2 : (F, D)
      cd    : (7, D)  rows = [bv, bo, g1, be1, b2, g2, be2]
      cw    : (2, 64) row0[:2D] = [bq*scale | bk],  row1[:F] = b1
      out   : (1, S, D)
    """
    D, H, hd, F = D_MODEL, NHEAD, HEAD_DIM, DIM_FF

    x = x_ref[0]                          # (S, D)
    qk_in = x + pos_ref[0]                # q = k = src + pos ; value = src

    bv, bo = cd_ref[0:1, :], cd_ref[1:2, :]
    g1, be1 = cd_ref[2:3, :], cd_ref[3:4, :]
    b2 = cd_ref[4:5, :]
    g2, be2 = cd_ref[5:6, :], cd_ref[6:7, :]
    bqk = cw_ref[0:1, :2 * D]             # q-bias already scaled by 1/sqrt(hd)
    b1 = cw_ref[1:2, :F]

    # ---- lane-dense Q|K and V projections (two 2-D matmuls) ----
    qk = jnp.dot(qk_in, wqk_ref[...],
                 preferred_element_type=jnp.float32) + bqk      # (S, 2D)
    v = jnp.dot(x, wv_ref[...],
                preferred_element_type=jnp.float32) + bv        # (S, D)

    # ---- per-head attention: heads recovered via static lane slices ----
    ctx_heads = []
    for h in range(H):
        lo, hi = h * hd, (h + 1) * hd
        q_h = qk[:, lo:hi]                # (S, hd) -- scale folded into Wq/bq
        k_h = qk[:, D + lo:D + hi]        # (S, hd)
        v_h = v[:, lo:hi]                 # (S, hd)
        # q.k^T as a contraction; no materialized transpose.
        s_h = lax.dot_general(q_h, k_h, (((1,), (1,)), ((), ())),
                              preferred_element_type=jnp.float32)   # (S, S)
        s_h = s_h - jnp.max(s_h, axis=-1, keepdims=True)
        p_h = jnp.exp(s_h)
        p_h = p_h * pl.reciprocal(jnp.sum(p_h, axis=-1, keepdims=True),
                                  approx=False)
        ctx_heads.append(jnp.dot(p_h, v_h,
                                 preferred_element_type=jnp.float32))  # (S, hd)

    # Lane-concat heads -> one depth-32 output-projection matmul (head sum
    # accumulated inside the MXU instead of VALU adds).
    ctx = jnp.concatenate(ctx_heads, axis=-1)                   # (S, D)
    attn = jnp.dot(ctx, wo_ref[...],
                   preferred_element_type=jnp.float32) + bo     # (S, D)

    # ---- residual + LayerNorm 1 (dropout1 == identity at inference) ----
    h1 = _layer_norm(x + attn, g1, be1)

    # ---- feed-forward: linear1 -> leaky_relu -> linear2 (dropout == identity)
    ff = jnp.dot(h1, w1_ref[...], preferred_element_type=jnp.float32) + b1
    ff = jnp.where(ff >= 0, ff, LEAKY_SLOPE * ff)
    ff = jnp.dot(ff, w2_ref[...], preferred_element_type=jnp.float32) + b2

    # ---- residual + LayerNorm 2 (dropout2 == identity) ----
    out_ref[0] = _layer_norm(h1 + ff, g2, be2)


def pack_params(p):
    """One-time wrapper-side layout plumbing (do NOT rebuild per call)."""
    scale = 1.0 / (HEAD_DIM ** 0.5)
    wqk = jnp.concatenate([p["wq"] * scale, p["wk"]], axis=1)       # (D, 2D)
    bqk = jnp.concatenate([p["bq"] * scale, p["bk"]], axis=1)       # (1, 2D)
    wide = max(2 * D_MODEL, DIM_FF)
    cw = jnp.zeros((2, wide), jnp.float32)
    cw = cw.at[0, :2 * D_MODEL].set(bqk[0])
    cw = cw.at[1, :DIM_FF].set(p["b1"][0])
    cd = jnp.concatenate([p["bv"], p["bo"], p["g1"], p["be1"],
                          p["b2"], p["g2"], p["be2"]], axis=0)      # (7, D)
    return {"wqk": wqk, "wv": p["wv"], "wo": p["wo"],
            "w1": p["w1"], "w2": p["w2"], "cd": cd, "cw": cw}


@jax.jit
def transformer_encoder_layer(x, pos, packed):
    """x, pos: (B, S, D).  packed: output of pack_params (precomputed once)."""
    B, S, D = x.shape
    full = lambda shape: pl.BlockSpec(shape, lambda b: (0,) * len(shape))
    grid_spec = pltpu.PrefetchScalarGridSpec(
        num_scalar_prefetch=0,
        grid=(B,),                                   # batch -> grid axis: no
        in_specs=[                                   # cross-batch mask needed
            pl.BlockSpec((1, S, D), lambda b: (b, 0, 0)),   # x
            pl.BlockSpec((1, S, D), lambda b: (b, 0, 0)),   # pos
            full(packed["wqk"].shape),
            full(packed["wv"].shape),
            full(packed["wo"].shape),
            full(packed["w1"].shape),
            full(packed["w2"].shape),
            full(packed["cd"].shape),
            full(packed["cw"].shape),
        ],
        out_specs=pl.BlockSpec((1, S, D), lambda b: (b, 0, 0)),
    )
    return pl.pallas_call(
        encoder_layer_kernel,
        out_shape=jax.ShapeDtypeStruct((B, S, D), jnp.float32),
        grid_spec=grid_spec,
        compiler_params=pltpu.CompilerParams(
            dimension_semantics=("parallel",)),      # v7x megacore; no-op on
    )(x, pos, packed["wqk"], packed["wv"], packed["wo"],  # v5e/v6e
      packed["w1"], packed["w2"], packed["cd"], packed["cw"])


# ------------------------- pure-JAX reference --------------------------------
def reference(x, pos, p):
    qk_in = x + pos
    q = qk_in @ p["wq"] + p["bq"]
    k = qk_in @ p["wk"] + p["bk"]
    v = x @ p["wv"] + p["bv"]
    B, S, D = x.shape
    q = q.reshape(B, S, NHEAD, HEAD_DIM).transpose(0, 2, 1, 3) / (HEAD_DIM ** 0.5)
    k = k.reshape(B, S, NHEAD, HEAD_DIM).transpose(0, 2, 1, 3)
    v = v.reshape(B, S, NHEAD, HEAD_DIM).transpose(0, 2, 1, 3)
    scores = jnp.einsum("bhqd,bhkd->bhqk", q, k)
    attn = jax.nn.softmax(scores, axis=-1)
    o = jnp.einsum("bhqk,bhkd->bhqd", attn, v).transpose(0, 2, 1, 3).reshape(B, S, D)
    o = o @ p["wo"] + p["bo"]
    h1 = _layer_norm(x + o, p["g1"], p["be1"])
    ff = h1 @ p["w1"] + p["b1"]
    ff = jnp.where(ff >= 0, ff, LEAKY_SLOPE * ff)
    ff = ff @ p["w2"] + p["b2"]
    return _layer_norm(h1 + ff, p["g2"], p["be2"])


def make_params(key):
    ks = jax.random.split(key, 12)
    s = 0.1
    # weights are stored pre-transposed so y = x @ W + b
    return {
        "wq": s * jax.random.normal(ks[0], (D_MODEL, D_MODEL), jnp.float32),
        "bq": s * jax.random.normal(ks[1], (1, D_MODEL), jnp.float32),
        "wk": s * jax.random.normal(ks[2], (D_MODEL, D_MODEL), jnp.float32),
        "bk": s * jax.random.normal(ks[3], (1, D_MODEL), jnp.float32),
        "wv": s * jax.random.normal(ks[4], (D_MODEL, D_MODEL), jnp.float32),
        "bv": s * jax.random.normal(ks[5], (1, D_MODEL), jnp.float32),
        "wo": s * jax.random.normal(ks[6], (D_MODEL, D_MODEL), jnp.float32),
        "bo": s * jax.random.normal(ks[7], (1, D_MODEL), jnp.float32),
        "g1": jnp.ones((1, D_MODEL), jnp.float32),
        "be1": jnp.zeros((1, D_MODEL), jnp.float32),
        "w1": s * jax.random.normal(ks[8], (D_MODEL, DIM_FF), jnp.float32),
        "b1": s * jax.random.normal(ks[9], (1, DIM_FF), jnp.float32),
        "w2": s * jax.random.normal(ks[10], (DIM_FF, D_MODEL), jnp.float32),
        "b2": s * jax.random.normal(ks[11], (1, D_MODEL), jnp.float32),
        "g2": jnp.ones((1, D_MODEL), jnp.float32),
        "be2": jnp.zeros((1, D_MODEL), jnp.float32),
    }


if __name__ == "__main__":
    key = jax.random.PRNGKey(0)
    kx, kp, kparam = jax.random.split(key, 3)
    x = jax.random.normal(kx, (BATCH, SEQ, D_MODEL), jnp.float32)
    pos = jax.random.normal(kp, (BATCH, SEQ, D_MODEL), jnp.float32)
    params = make_params(kparam)

    packed = pack_params(params)           # one-time packing, outside the call
    packed = jax.block_until_ready(packed)

    out = transformer_encoder_layer(x, pos, packed)
    out = jax.block_until_ready(out)

    ref = reference(x, pos, params)
    assert out.shape == (BATCH, SEQ, D_MODEL)
    err = float(jnp.max(jnp.abs(out - ref)))
    assert jnp.allclose(out, ref, rtol=2e-3, atol=2e-3), err

    print("KERNEL_OK")
</pallas_src>

<mosaic_0001>
module attributes {stable_mosaic.version = 11 : i64} {
  func.func @encoder_layer_kernel(%arg0: i32, %arg1: memref<1x8x32xf32, #tpu.memory_space<vmem>>, %arg2: memref<1x8x32xf32, #tpu.memory_space<vmem>>, %arg3: memref<32x64xf32, #tpu.memory_space<vmem>>, %arg4: memref<32x32xf32, #tpu.memory_space<vmem>>, %arg5: memref<32x32xf32, #tpu.memory_space<vmem>>, %arg6: memref<32x64xf32, #tpu.memory_space<vmem>>, %arg7: memref<64x32xf32, #tpu.memory_space<vmem>>, %arg8: memref<7x32xf32, #tpu.memory_space<vmem>>, %arg9: memref<2x64xf32, #tpu.memory_space<vmem>>, %arg10: memref<1x8x32xf32, #tpu.memory_space<vmem>>) attributes {dimension_semantics = [#tpu.dimension_semantics<parallel>], iteration_bounds = array<i64: 2>, scalar_prefetch = 0 : i64, scratch_operands = 0 : i64, tpu.core_type = #tpu.core_type<tc>, window_params = [{transform_indices = @transform_0, window_bounds = array<i64: 1, 8, 32>}, {transform_indices = @transform_1, window_bounds = array<i64: 1, 8, 32>}, {pipeline_mode = #tpu.pipeline_mode<synchronous>, transform_indices = @transform_2, window_bounds = array<i64: 32, 64>}, {pipeline_mode = #tpu.pipeline_mode<synchronous>, transform_indices = @transform_3, window_bounds = array<i64: 32, 32>}, {pipeline_mode = #tpu.pipeline_mode<synchronous>, transform_indices = @transform_4, window_bounds = array<i64: 32, 32>}, {pipeline_mode = #tpu.pipeline_mode<synchronous>, transform_indices = @transform_5, window_bounds = array<i64: 32, 64>}, {pipeline_mode = #tpu.pipeline_mode<synchronous>, transform_indices = @transform_6, window_bounds = array<i64: 64, 32>}, {pipeline_mode = #tpu.pipeline_mode<synchronous>, transform_indices = @transform_7, window_bounds = array<i64: 7, 32>}, {pipeline_mode = #tpu.pipeline_mode<synchronous>, transform_indices = @transform_8, window_bounds = array<i64: 2, 64>}, {transform_indices = @transform_9, window_bounds = array<i64: 1, 8, 32>}]} {
    %c0 = arith.constant 0 : index
    %c0_0 = arith.constant 0 : index
    %c0_1 = arith.constant 0 : index
    %0 = vector.load %arg1[%c0, %c0_0, %c0_1] : memref<1x8x32xf32, #tpu.memory_space<vmem>>, vector<1x8x32xf32>
    %1 = vector.shape_cast %0 : vector<1x8x32xf32> to vector<8x32xf32>
    %c0_2 = arith.constant 0 : index
    %c0_3 = arith.constant 0 : index
    %c0_4 = arith.constant 0 : index
    %2 = vector.load %arg2[%c0_2, %c0_3, %c0_4] : memref<1x8x32xf32, #tpu.memory_space<vmem>>, vector<1x8x32xf32>
    %3 = vector.shape_cast %2 : vector<1x8x32xf32> to vector<8x32xf32>
    %4 = arith.addf %1, %3 : vector<8x32xf32>
    %c0_5 = arith.constant 0 : index
    %c0_6 = arith.constant 0 : index
    %5 = vector.load %arg8[%c0_5, %c0_6] : memref<7x32xf32, #tpu.memory_space<vmem>>, vector<1x32xf32>
    %c1 = arith.constant 1 : index
    %c0_7 = arith.constant 0 : index
    %6 = vector.load %arg8[%c1, %c0_7] : memref<7x32xf32, #tpu.memory_space<vmem>>, vector<1x32xf32>
    %c2 = arith.constant 2 : index
    %c0_8 = arith.constant 0 : index
    %7 = vector.load %arg8[%c2, %c0_8] : memref<7x32xf32, #tpu.memory_space<vmem>>, vector<1x32xf32>
    %c3 = arith.constant 3 : index
    %c0_9 = arith.constant 0 : index
    %8 = vector.load %arg8[%c3, %c0_9] : memref<7x32xf32, #tpu.memory_space<vmem>>, vector<1x32xf32>
    %c4 = arith.constant 4 : index
    %c0_10 = arith.constant 0 : index
    %9 = vector.load %arg8[%c4, %c0_10] : memref<7x32xf32, #tpu.memory_space<vmem>>, vector<1x32xf32>
    %c5 = arith.constant 5 : index
    %c0_11 = arith.constant 0 : index
    %10 = vector.load %arg8[%c5, %c0_11] : memref<7x32xf32, #tpu.memory_space<vmem>>, vector<1x32xf32>
    %c6 = arith.constant 6 : index
    %c0_12 = arith.constant 0 : index
    %11 = vector.load %arg8[%c6, %c0_12] : memref<7x32xf32, #tpu.memory_space<vmem>>, vector<1x32xf32>
    %c0_13 = arith.constant 0 : index
    %c0_14 = arith.constant 0 : index
    %12 = vector.load %arg9[%c0_13, %c0_14] : memref<2x64xf32, #tpu.memory_space<vmem>>, vector<1x64xf32>
    %c1_15 = arith.constant 1 : index
    %c0_16 = arith.constant 0 : index
    %13 = vector.load %arg9[%c1_15, %c0_16] : memref<2x64xf32, #tpu.memory_space<vmem>>, vector<1x64xf32>
    %c0_17 = arith.constant 0 : index
    %c0_18 = arith.constant 0 : index
    %14 = vector.load %arg3[%c0_17, %c0_18] : memref<32x64xf32, #tpu.memory_space<vmem>>, vector<32x64xf32>
    %cst = arith.constant dense<0.000000e+00> : vector<8x64xf32>
    %15 = tpu.matmul %4, %14, %cst {dimension_numbers = #tpu.dot_dimension_numbers<[1], [0], [0], [1], [0, 0, 1, 1], [], []>} : vector<8x32xf32>, vector<32x64xf32>, vector<8x64xf32> -> vector<8x64xf32>
    %16 = vector.broadcast %12 : vector<1x64xf32> to vector<8x64xf32>
    %17 = arith.addf %15, %16 : vector<8x64xf32>
    %c0_19 = arith.constant 0 : index
    %c0_20 = arith.constant 0 : index
    %18 = vector.load %arg4[%c0_19, %c0_20] : memref<32x32xf32, #tpu.memory_space<vmem>>, vector<32x32xf32>
    %cst_21 = arith.constant dense<0.000000e+00> : vector<8x32xf32>
    %19 = tpu.matmul %1, %18, %cst_21 {dimension_numbers = #tpu.dot_dimension_numbers<[1], [0], [0], [1], [0, 0, 1, 1], [], []>} : vector<8x32xf32>, vector<32x32xf32>, vector<8x32xf32> -> vector<8x32xf32>
    %20 = vector.broadcast %5 : vector<1x32xf32> to vector<8x32xf32>
    %21 = arith.addf %19, %20 : vector<8x32xf32>
    %22 = vector.extract_strided_slice %17 {offsets = [0, 0], sizes = [8, 8], strides = [1, 1]} : vector<8x64xf32> to vector<8x8xf32>
    %23 = vector.extract_strided_slice %17 {offsets = [0, 32], sizes = [8, 8], strides = [1, 1]} : vector<8x64xf32> to vector<8x8xf32>
    %24 = vector.extract_strided_slice %21 {offsets = [0, 0], sizes = [8, 8], strides = [1, 1]} : vector<8x32xf32> to vector<8x8xf32>
    %cst_22 = arith.constant dense<0.000000e+00> : vector<8x8xf32>
    %25 = tpu.matmul %22, %23, %cst_22 {dimension_numbers = #tpu.dot_dimension_numbers<[1], [1], [0], [0], [0, 0, 1, 0], [], []>} : vector<8x8xf32>, vector<8x8xf32>, vector<8x8xf32> -> vector<8x8xf32>
    %cst_23 = arith.constant dense<0xFF800000> : vector<8xf32>
    %26 = vector.multi_reduction <maximumf>, %25, %cst_23 [1] : vector<8x8xf32> to vector<8xf32>
    %27 = vector.shape_cast %26 : vector<8xf32> to vector<8x1xf32>
    %28 = vector.broadcast %27 : vector<8x1xf32> to vector<8x8xf32>
    %29 = arith.subf %25, %28 : vector<8x8xf32>
    %30 = math.exp %29 : vector<8x8xf32>
    %cst_24 = arith.constant dense<0.000000e+00> : vector<8xf32>
    %31 = vector.multi_reduction <add>, %30, %cst_24 [1] : vector<8x8xf32> to vector<8xf32>
    %32 = vector.shape_cast %31 : vector<8xf32> to vector<8x1xf32>
    %33 = tpu.reciprocal %32 : vector<8x1xf32> -> vector<8x1xf32>
    %34 = vector.broadcast %33 : vector<8x1xf32> to vector<8x8xf32>
    %35 = arith.mulf %30, %34 : vector<8x8xf32>
    %cst_25 = arith.constant dense<0.000000e+00> : vector<8x8xf32>
    %36 = tpu.matmul %35, %24, %cst_25 {dimension_numbers = #tpu.dot_dimension_numbers<[1], [0], [0], [1], [0, 0, 1, 1], [], []>} : vector<8x8xf32>, vector<8x8xf32>, vector<8x8xf32> -> vector<8x8xf32>
    %37 = vector.extract_strided_slice %17 {offsets = [0, 8], sizes = [8, 8], strides = [1, 1]} : vector<8x64xf32> to vector<8x8xf32>
    %38 = vector.extract_strided_slice %17 {offsets = [0, 40], sizes = [8, 8], strides = [1, 1]} : vector<8x64xf32> to vector<8x8xf32>
    %39 = vector.extract_strided_slice %21 {offsets = [0, 8], sizes = [8, 8], strides = [1, 1]} : vector<8x32xf32> to vector<8x8xf32>
    %cst_26 = arith.constant dense<0.000000e+00> : vector<8x8xf32>
    %40 = tpu.matmul %37, %38, %cst_26 {dimension_numbers = #tpu.dot_dimension_numbers<[1], [1], [0], [0], [0, 0, 1, 0], [], []>} : vector<8x8xf32>, vector<8x8xf32>, vector<8x8xf32> -> vector<8x8xf32>
    %cst_27 = arith.constant dense<0xFF800000> : vector<8xf32>
    %41 = vector.multi_reduction <maximumf>, %40, %cst_27 [1] : vector<8x8xf32> to vector<8xf32>
    %42 = vector.shape_cast %41 : vector<8xf32> to vector<8x1xf32>
    %43 = vector.broadcast %42 : vector<8x1xf32> to vector<8x8xf32>
    %44 = arith.subf %40, %43 : vector<8x8xf32>
    %45 = math.exp %44 : vector<8x8xf32>
    %cst_28 = arith.constant dense<0.000000e+00> : vector<8xf32>
    %46 = vector.multi_reduction <add>, %45, %cst_28 [1] : vector<8x8xf32> to vector<8xf32>
    %47 = vector.shape_cast %46 : vector<8xf32> to vector<8x1xf32>
    %48 = tpu.reciprocal %47 : vector<8x1xf32> -> vector<8x1xf32>
    %49 = vector.broadcast %48 : vector<8x1xf32> to vector<8x8xf32>
    %50 = arith.mulf %45, %49 : vector<8x8xf32>
    %cst_29 = arith.constant dense<0.000000e+00> : vector<8x8xf32>
    %51 = tpu.matmul %50, %39, %cst_29 {dimension_numbers = #tpu.dot_dimension_numbers<[1], [0], [0], [1], [0, 0, 1, 1], [], []>} : vector<8x8xf32>, vector<8x8xf32>, vector<8x8xf32> -> vector<8x8xf32>
    %52 = vector.extract_strided_slice %17 {offsets = [0, 16], sizes = [8, 8], strides = [1, 1]} : vector<8x64xf32> to vector<8x8xf32>
    %53 = vector.extract_strided_slice %17 {offsets = [0, 48], sizes = [8, 8], strides = [1, 1]} : vector<8x64xf32> to vector<8x8xf32>
    %54 = vector.extract_strided_slice %21 {offsets = [0, 16], sizes = [8, 8], strides = [1, 1]} : vector<8x32xf32> to vector<8x8xf32>
    %cst_30 = arith.constant dense<0.000000e+00> : vector<8x8xf32>
    %55 = tpu.matmul %52, %53, %cst_30 {dimension_numbers = #tpu.dot_dimension_numbers<[1], [1], [0], [0], [0, 0, 1, 0], [], []>} : vector<8x8xf32>, vector<8x8xf32>, vector<8x8xf32> -> vector<8x8xf32>
    %cst_31 = arith.constant dense<0xFF800000> : vector<8xf32>
    %56 = vector.multi_reduction <maximumf>, %55, %cst_31 [1] : vector<8x8xf32> to vector<8xf32>
    %57 = vector.shape_cast %56 : vector<8xf32> to vector<8x1xf32>
    %58 = vector.broadcast %57 : vector<8x1xf32> to vector<8x8xf32>
    %59 = arith.subf %55, %58 : vector<8x8xf32>
    %60 = math.exp %59 : vector<8x8xf32>
    %cst_32 = arith.constant dense<0.000000e+00> : vector<8xf32>
    %61 = vector.multi_reduction <add>, %60, %cst_32 [1] : vector<8x8xf32> to vector<8xf32>
    %62 = vector.shape_cast %61 : vector<8xf32> to vector<8x1xf32>
    %63 = tpu.reciprocal %62 : vector<8x1xf32> -> vector<8x1xf32>
    %64 = vector.broadcast %63 : vector<8x1xf32> to vector<8x8xf32>
    %65 = arith.mulf %60, %64 : vector<8x8xf32>
    %cst_33 = arith.constant dense<0.000000e+00> : vector<8x8xf32>
    %66 = tpu.matmul %65, %54, %cst_33 {dimension_numbers = #tpu.dot_dimension_numbers<[1], [0], [0], [1], [0, 0, 1, 1], [], []>} : vector<8x8xf32>, vector<8x8xf32>, vector<8x8xf32> -> vector<8x8xf32>
    %67 = vector.extract_strided_slice %17 {offsets = [0, 24], sizes = [8, 8], strides = [1, 1]} : vector<8x64xf32> to vector<8x8xf32>
    %68 = vector.extract_strided_slice %17 {offsets = [0, 56], sizes = [8, 8], strides = [1, 1]} : vector<8x64xf32> to vector<8x8xf32>
    %69 = vector.extract_strided_slice %21 {offsets = [0, 24], sizes = [8, 8], strides = [1, 1]} : vector<8x32xf32> to vector<8x8xf32>
    %cst_34 = arith.constant dense<0.000000e+00> : vector<8x8xf32>
    %70 = tpu.matmul %67, %68, %cst_34 {dimension_numbers = #tpu.dot_dimension_numbers<[1], [1], [0], [0], [0, 0, 1, 0], [], []>} : vector<8x8xf32>, vector<8x8xf32>, vector<8x8xf32> -> vector<8x8xf32>
    %cst_35 = arith.constant dense<0xFF800000> : vector<8xf32>
    %71 = vector.multi_reduction <maximumf>, %70, %cst_35 [1] : vector<8x8xf32> to vector<8xf32>
    %72 = vector.shape_cast %71 : vector<8xf32> to vector<8x1xf32>
    %73 = vector.broadcast %72 : vector<8x1xf32> to vector<8x8xf32>
    %74 = arith.subf %70, %73 : vector<8x8xf32>
    %75 = math.exp %74 : vector<8x8xf32>
    %cst_36 = arith.constant dense<0.000000e+00> : vector<8xf32>
    %76 = vector.multi_reduction <add>, %75, %cst_36 [1] : vector<8x8xf32> to vector<8xf32>
    %77 = vector.shape_cast %76 : vector<8xf32> to vector<8x1xf32>
    %78 = tpu.reciprocal %77 : vector<8x1xf32> -> vector<8x1xf32>
    %79 = vector.broadcast %78 : vector<8x1xf32> to vector<8x8xf32>
    %80 = arith.mulf %75, %79 : vector<8x8xf32>
    %cst_37 = arith.constant dense<0.000000e+00> : vector<8x8xf32>
    %81 = tpu.matmul %80, %69, %cst_37 {dimension_numbers = #tpu.dot_dimension_numbers<[1], [0], [0], [1], [0, 0, 1, 1], [], []>} : vector<8x8xf32>, vector<8x8xf32>, vector<8x8xf32> -> vector<8x8xf32>
    %82 = tpu.concatenate %36, %51, %66, %81 in 1 : vector<8x8xf32>, vector<8x8xf32>, vector<8x8xf32>, vector<8x8xf32> -> vector<8x32xf32>
    %c0_38 = arith.constant 0 : index
    %c0_39 = arith.constant 0 : index
    %83 = vector.load %arg5[%c0_38, %c0_39] : memref<32x32xf32, #tpu.memory_space<vmem>>, vector<32x32xf32>
    %cst_40 = arith.constant dense<0.000000e+00> : vector<8x32xf32>
    %84 = tpu.matmul %82, %83, %cst_40 {dimension_numbers = #tpu.dot_dimension_numbers<[1], [0], [0], [1], [0, 0, 1, 1], [], []>} : vector<8x32xf32>, vector<32x32xf32>, vector<8x32xf32> -> vector<8x32xf32>
    %85 = vector.broadcast %6 : vector<1x32xf32> to vector<8x32xf32>
    %86 = arith.addf %84, %85 : vector<8x32xf32>
    %87 = arith.addf %1, %86 : vector<8x32xf32>
    %cst_41 = arith.constant dense<0.000000e+00> : vector<8xf32>
    %88 = vector.multi_reduction <add>, %87, %cst_41 [1] : vector<8x32xf32> to vector<8xf32>
    %89 = vector.shape_cast %88 : vector<8xf32> to vector<8x1xf32>
    %cst_42 = arith.constant 3.200000e+01 : f32
    %90 = vector.broadcast %cst_42 : f32 to vector<8x1xf32>
    %91 = arith.divf %89, %90 : vector<8x1xf32>
    %92 = vector.broadcast %91 : vector<8x1xf32> to vector<8x32xf32>
    %93 = arith.subf %87, %92 : vector<8x32xf32>
    %94 = arith.mulf %93, %93 : vector<8x32xf32>
    %cst_43 = arith.constant dense<0.000000e+00> : vector<8xf32>
    %95 = vector.multi_reduction <add>, %94, %cst_43 [1] : vector<8x32xf32> to vector<8xf32>
    %96 = vector.shape_cast %95 : vector<8xf32> to vector<8x1xf32>
    %cst_44 = arith.constant 3.200000e+01 : f32
    %97 = vector.broadcast %cst_44 : f32 to vector<8x1xf32>
    %98 = arith.divf %96, %97 : vector<8x1xf32>
    %99 = vector.broadcast %91 : vector<8x1xf32> to vector<8x32xf32>
    %100 = arith.subf %87, %99 : vector<8x32xf32>
    %cst_45 = arith.constant 9.99999974E-6 : f32
    %101 = vector.broadcast %cst_45 : f32 to vector<8x1xf32>
    %102 = arith.addf %98, %101 : vector<8x1xf32>
    %103 = math.rsqrt %102 : vector<8x1xf32>
    %104 = vector.broadcast %103 : vector<8x1xf32> to vector<8x32xf32>
    %105 = arith.mulf %100, %104 : vector<8x32xf32>
    %106 = vector.broadcast %7 : vector<1x32xf32> to vector<8x32xf32>
    %107 = arith.mulf %105, %106 : vector<8x32xf32>
    %108 = vector.broadcast %8 : vector<1x32xf32> to vector<8x32xf32>
    %109 = arith.addf %107, %108 : vector<8x32xf32>
    %c0_46 = arith.constant 0 : index
    %c0_47 = arith.constant 0 : index
    %110 = vector.load %arg6[%c0_46, %c0_47] : memref<32x64xf32, #tpu.memory_space<vmem>>, vector<32x64xf32>
    %cst_48 = arith.constant dense<0.000000e+00> : vector<8x64xf32>
    %111 = tpu.matmul %109, %110, %cst_48 {dimension_numbers = #tpu.dot_dimension_numbers<[1], [0], [0], [1], [0, 0, 1, 1], [], []>} : vector<8x32xf32>, vector<32x64xf32>, vector<8x64xf32> -> vector<8x64xf32>
    %112 = vector.broadcast %13 : vector<1x64xf32> to vector<8x64xf32>
    %113 = arith.addf %111, %112 : vector<8x64xf32>
    %cst_49 = arith.constant 0.000000e+00 : f32
    %114 = vector.broadcast %cst_49 : f32 to vector<8x64xf32>
    %115 = arith.cmpf oge, %113, %114 : vector<8x64xf32>
    %cst_50 = arith.constant 0.00999999977 : f32
    %116 = vector.broadcast %cst_50 : f32 to vector<8x64xf32>
    %117 = arith.mulf %116, %113 : vector<8x64xf32>
    %118 = arith.select %115, %113, %117 : vector<8x64xi1>, vector<8x64xf32>
    %c0_51 = arith.constant 0 : index
    %c0_52 = arith.constant 0 : index
    %119 = vector.load %arg7[%c0_51, %c0_52] : memref<64x32xf32, #tpu.memory_space<vmem>>, vector<64x32xf32>
    %cst_53 = arith.constant dense<0.000000e+00> : vector<8x32xf32>
    %120 = tpu.matmul %118, %119, %cst_53 {dimension_numbers = #tpu.dot_dimension_numbers<[1], [0], [0], [1], [0, 0, 1, 1], [], []>} : vector<8x64xf32>, vector<64x32xf32>, vector<8x32xf32> -> vector<8x32xf32>
    %121 = vector.broadcast %9 : vector<1x32xf32> to vector<8x32xf32>
    %122 = arith.addf %120, %121 : vector<8x32xf32>
    %123 = arith.addf %109, %122 : vector<8x32xf32>
    %cst_54 = arith.constant dense<0.000000e+00> : vector<8xf32>
    %124 = vector.multi_reduction <add>, %123, %cst_54 [1] : vector<8x32xf32> to vector<8xf32>
    %125 = vector.shape_cast %124 : vector<8xf32> to vector<8x1xf32>
    %cst_55 = arith.constant 3.200000e+01 : f32
    %126 = vector.broadcast %cst_55 : f32 to vector<8x1xf32>
    %127 = arith.divf %125, %126 : vector<8x1xf32>
    %128 = vector.broadcast %127 : vector<8x1xf32> to vector<8x32xf32>
    %129 = arith.subf %123, %128 : vector<8x32xf32>
    %130 = arith.mulf %129, %129 : vector<8x32xf32>
    %cst_56 = arith.constant dense<0.000000e+00> : vector<8xf32>
    %131 = vector.multi_reduction <add>, %130, %cst_56 [1] : vector<8x32xf32> to vector<8xf32>
    %132 = vector.shape_cast %131 : vector<8xf32> to vector<8x1xf32>
    %cst_57 = arith.constant 3.200000e+01 : f32
    %133 = vector.broadcast %cst_57 : f32 to vector<8x1xf32>
    %134 = arith.divf %132, %133 : vector<8x1xf32>
    %135 = vector.broadcast %127 : vector<8x1xf32> to vector<8x32xf32>
    %136 = arith.subf %123, %135 : vector<8x32xf32>
    %cst_58 = arith.constant 9.99999974E-6 : f32
    %137 = vector.broadcast %cst_58 : f32 to vector<8x1xf32>
    %138 = arith.addf %134, %137 : vector<8x1xf32>
    %139 = math.rsqrt %138 : vector<8x1xf32>
    %140 = vector.broadcast %139 : vector<8x1xf32> to vector<8x32xf32>
    %141 = arith.mulf %136, %140 : vector<8x32xf32>
    %142 = vector.broadcast %10 : vector<1x32xf32> to vector<8x32xf32>
    %143 = arith.mulf %141, %142 : vector<8x32xf32>
    %144 = vector.broadcast %11 : vector<1x32xf32> to vector<8x32xf32>
    %145 = arith.addf %143, %144 : vector<8x32xf32>
    %c0_59 = arith.constant 0 : index
    %c0_60 = arith.constant 0 : index
    %c0_61 = arith.constant 0 : index
    %146 = vector.load %arg10[%c0_59, %c0_60, %c0_61] : memref<1x8x32xf32, #tpu.memory_space<vmem>>, vector<1x8x32xf32>
    %147 = vector.shape_cast %146 : vector<1x8x32xf32> to vector<8x32xf32>
    %148 = vector.shape_cast %145 : vector<8x32xf32> to vector<1x8x32xf32>
    tpu.vector_store %arg10[%c0_59, %c0_60, %c0_61], %148 {strides = array<i32>} : memref<1x8x32xf32, #tpu.memory_space<vmem>>, vector<1x8x32xf32>,
    return
  }
  func.func @transform_0(%arg0: i32) -> (i32, i32, i32) {
    %c0_i32 = arith.constant 0 : i32
    %c0_i32_0 = arith.constant 0 : i32
    %c0_i32_1 = arith.constant 0 : i32
    return %arg0, %c0_i32, %c0_i32_0 : i32, i32, i32
  }
  func.func @transform_1(%arg0: i32) -> (i32, i32, i32) {
    %c0_i32 = arith.constant 0 : i32
    %c0_i32_0 = arith.constant 0 : i32
    %c0_i32_1 = arith.constant 0 : i32
    return %arg0, %c0_i32, %c0_i32_0 : i32, i32, i32
  }
  func.func @transform_2(%arg0: i32) -> (i32, i32) {
    %c0_i32 = arith.constant 0 : i32
    %c0_i32_0 = arith.constant 0 : i32
    %c0_i32_1 = arith.constant 0 : i32
    return %c0_i32, %c0_i32_0 : i32, i32
  }
  func.func @transform_3(%arg0: i32) -> (i32, i32) {
    %c0_i32 = arith.constant 0 : i32
    %c0_i32_0 = arith.constant 0 : i32
    %c0_i32_1 = arith.constant 0 : i32
    return %c0_i32, %c0_i32_0 : i32, i32
  }
  func.func @transform_4(%arg0: i32) -> (i32, i32) {
    %c0_i32 = arith.constant 0 : i32
    %c0_i32_0 = arith.constant 0 : i32
    %c0_i32_1 = arith.constant 0 : i32
    return %c0_i32, %c0_i32_0 : i32, i32
  }
  func.func @transform_5(%arg0: i32) -> (i32, i32) {
    %c0_i32 = arith.constant 0 : i32
    %c0_i32_0 = arith.constant 0 : i32
    %c0_i32_1 = arith.constant 0 : i32
    return %c0_i32, %c0_i32_0 : i32, i32
  }
  func.func @transform_6(%arg0: i32) -> (i32, i32) {
    %c0_i32 = arith.constant 0 : i32
    %c0_i32_0 = arith.constant 0 : i32
    %c0_i32_1 = arith.constant 0 : i32
    return %c0_i32, %c0_i32_0 : i32, i32
  }
  func.func @transform_7(%arg0: i32) -> (i32, i32) {
    %c0_i32 = arith.constant 0 : i32
    %c0_i32_0 = arith.constant 0 : i32
    %c0_i32_1 = arith.constant 0 : i32
    return %c0_i32, %c0_i32_0 : i32, i32
  }
  func.func @transform_8(%arg0: i32) -> (i32, i32) {
    %c0_i32 = arith.constant 0 : i32
    %c0_i32_0 = arith.constant 0 : i32
    %c0_i32_1 = arith.constant 0 : i32
    return %c0_i32, %c0_i32_0 : i32, i32
  }
  func.func @transform_9(%arg0: i32) -> (i32, i32, i32) {
    %c0_i32 = arith.constant 0 : i32
    %c0_i32_0 = arith.constant 0 : i32
    %c0_i32_1 = arith.constant 0 : i32
    return %arg0, %c0_i32, %c0_i32_0 : i32, i32, i32
  }
}

</mosaic_0001>

<llo_original>
// kernel: transformer_encoder_layer.1
$region0: #{transformer_encoder_layer.1}
  #allocation0 [shape = 'u32[]', space=smem, size = 0x4, offset = 0x4, fixed_abs, tag = 'smem constant byte address 0x4 - core index']
  #allocation1 [shape = 'u32[72,128]{1,0:T(1,128)}', space=vmem, size = 0x9000, scoped, tag = 'internal scratch']
  %s0 = inlined_call_operand.hbm [shape: f32[2,8,32], index: 0, kind: input, shape index: {}]
  %s1 = inlined_call_operand.hbm [shape: f32[2,8,32], index: 1, kind: input, shape index: {}]
  %s2 = inlined_call_operand.vmem [shape: f32[32,64], index: 2, kind: input, shape index: {}]
  %s3 = inlined_call_operand.vmem [shape: f32[32,32], index: 3, kind: input, shape index: {}]
  %s4 = inlined_call_operand.vmem [shape: f32[32,32], index: 4, kind: input, shape index: {}]
  %s5 = inlined_call_operand.hbm [shape: f32[32,64], index: 5, kind: input, shape index: {}]
  %s6 = inlined_call_operand.vmem [shape: f32[64,32], index: 6, kind: input, shape index: {}]
  %s7 = inlined_call_operand.hbm [shape: f32[7,32], index: 7, kind: input, shape index: {}]
  %s8 = inlined_call_operand.hbm [shape: f32[2,64], index: 8, kind: input, shape index: {}]
  %s9 = inlined_call_operand.hbm [shape: f32[2,8,32], index: 9, kind: output, shape index: {}]
  %s10 = sld [smem:[#allocation0]]
  $region89: #{transformer_encoder_layer.1} parent=0
    _
  %s12 = ssub.s32 1, %s10
  %s13 = scalar_select 0, %s12, %s10
  $region1: #{transformer_encoder_layer.1} parent=0
    #allocation2 [shape = 'u8[8192]{0}', space=vmem, size = 0x2000, scoped, tag = 'input window, operand 0']
    #allocation3 [shape = 's32[2]{0}', space=sflag, size = 0x8, scoped, tag = 'scoped memory for transformer_encoder_layer.1']
    #allocation4 [shape = 's32[2]{0}', space=sflag, size = 0x8, scoped, tag = 'scoped memory for transformer_encoder_layer.1']
    #allocation5 [shape = 'u8[8192]{0}', space=vmem, size = 0x2000, scoped, tag = 'input window, operand 1']
    #allocation6 [shape = 's32[2]{0}', space=sflag, size = 0x8, scoped, tag = 'scoped memory for transformer_encoder_layer.1']
    #allocation7 [shape = 'u8[16384]{0}', space=vmem, size = 0x4000, scoped, tag = 'input window, operand 5, single buffered']
    #allocation8 [shape = 'u8[4096]{0}', space=vmem, size = 0x1000, scoped, tag = 'input window, operand 7, single buffered']
    #allocation9 [shape = 's32[1]{0}', space=sflag, size = 0x4, scoped, tag = 'scoped memory for transformer_encoder_layer.1']
    #allocation10 [shape = 'u8[1024]{0}', space=vmem, size = 0x400, scoped, tag = 'input window, operand 8, single buffered']
    #allocation11 [shape = 'u8[8192]{0}', space=vmem, size = 0x2000, scoped, tag = 'output window, operand 0']
    %14 = vsyncpa [#allocation3], 0
    %s15 = scalar_lea.sflag [#allocation3], 1
    %16 = vsyncpa %s15, 0
    %17 = vsyncpa [#allocation6], 0
    %s18 = scalar_lea.sflag [#allocation6], 1
    %19 = vsyncpa %s18, 0
    %20 = vsyncpa [#allocation9], 0
    %21 = vsyncpa [#allocation4], 0
    %s22 = scalar_lea.sflag [#allocation4], 1
    %23 = vsyncpa %s22, 0
    loop: start=0, step=1, limit=4
    $region2: #{transformer_encoder_layer.1} parent=1 // loop_pre_header
      _
    $region3: #{transformer_encoder_layer.1} parent=1 // loop_header
      %s25 = sphi 0, %s29
      %p26 = scmp.ge.s32.totalorder %s25, 4
      %s35 = sphi 0, %s37
      %s38 = sphi 0, %s35
      %s39 = sphi 0, %s38
      %s55 = sphi 0, %s39
      %s61 = sphi 0, %s63
      %s64 = sphi 0, %s61
      %s65 = sphi 0, %s64
      %s81 = sphi 0, %s65
      %s85 = sphi 0, %s85
      %s87 = sphi 0, %s85
      %s88 = sphi 0, %s87
      %s102 = sphi 0, %s88
      %s106 = sphi 0, %s106
      %s108 = sphi 0, %s106
      %s109 = sphi 0, %s108
      %s123 = sphi 0, %s109
      %s127 = sphi 0, %s127
      %s129 = sphi 0, %s127
      %s130 = sphi 0, %s129
      %s144 = sphi 0, %s130
      %s148 = sphi 0, %s148
      %s150 = sphi 0, %s148
      %s151 = sphi 0, %s150
      %s165 = sphi 0, %s151
      %s169 = sphi 0, %s169
      %s171 = sphi 0, %s169
      %s172 = sphi 0, %s171
      %s186 = sphi 0, %s172
      %s190 = sphi 0, %s190
      %s192 = sphi 0, %s190
      %s193 = sphi 0, %s192
      %s207 = sphi 0, %s193
      %s211 = sphi 0, %s211
      %s213 = sphi 0, %s211
      %s214 = sphi 0, %s213
      %s228 = sphi 0, %s214
      %s234 = sphi 0, %s236
      %s237 = sphi 0, %s234
      %s238 = sphi 0, %s237
      %s254 = sphi 0, %s238
    $region4: #{transformer_encoder_layer.1} parent=1 // loop_header_branch
      %28 = sbr.rel (%p26) target = $region8
    $region5: #{transformer_encoder_layer.1} parent=1 // loop_body
      %s30 = ssub.s32 %s25, 1
      %s31 = ssub.s32 %s25, 2
      %s32 = sadd.s32 %s25, 1
      %s33 = ssub.s32 %s25, %s32
      %p34 = scmp.eq.s32.totalorder %s33, 0
      %s36 = sadd.s32 %s35, 1
      %s37 = scalar_select %p34, %s35, %s36
      %p40 = pneg %p34
      %p41 = scmp.eq.s32.totalorder %s25, 1
      %p42 = por %p40, %p41
      %p43 = scmp.ne.s32.totalorder %s35, %s38
      %p44 = scmp.eq.s32.totalorder %s25, 0
      %p45 = por %p43, %p44
      %p46 = scmp.ne.s32.totalorder %s35, %s38
      %p47 = scmp.eq.s32.totalorder %s30, 1
      %p48 = por %p46, %p47
      %p49 = scmp.ne.s32.totalorder %s38, %s39
      %p50 = scmp.eq.s32.totalorder %s30, 0
      %p51 = por %p49, %p50
      %p52 = scmp.ne.s32.totalorder %s38, %s39
      %p53 = scmp.eq.s32.totalorder %s31, 1
      %p54 = por %p52, %p53
      %p56 = scmp.ne.s32.totalorder %s39, %s55
      %p57 = scmp.eq.s32.totalorder %s31, 0
      %p58 = por %p56, %p57
      %s59 = ssub.s32 %s25, %s32
      %p60 = scmp.eq.s32.totalorder %s59, 0
      %s62 = sadd.s32 %s61, 1
      %s63 = scalar_select %p60, %s61, %s62
      %p66 = pneg %p60
      %p67 = scmp.eq.s32.totalorder %s25, 1
      %p68 = por %p66, %p67
      %p69 = scmp.ne.s32.totalorder %s61, %s64
      %p70 = scmp.eq.s32.totalorder %s25, 0
      %p71 = por %p69, %p70
      %p72 = scmp.ne.s32.totalorder %s61, %s64
      %p73 = scmp.eq.s32.totalorder %s30, 1
      %p74 = por %p72, %p73
      %p75 = scmp.ne.s32.totalorder %s64, %s65
      %p76 = scmp.eq.s32.totalorder %s30, 0
      %p77 = por %p75, %p76
      %p78 = scmp.ne.s32.totalorder %s64, %s65
      %p79 = scmp.eq.s32.totalorder %s31, 1
      %p80 = por %p78, %p79
      %p82 = scmp.ne.s32.totalorder %s65, %s81
      %p83 = scmp.eq.s32.totalorder %s31, 0
      %p84 = por %p82, %p83
      %s86 = sadd.s32 %s85, 1
      %p89 = scmp.eq.s32.totalorder %s25, 1
      %p90 = scmp.ne.s32.totalorder %s85, %s87
      %p91 = scmp.eq.s32.totalorder %s25, 0
      %p92 = por %p90, %p91
      %p93 = scmp.ne.s32.totalorder %s85, %s87
      %p94 = scmp.eq.s32.totalorder %s30, 1
      %p95 = por %p93, %p94
      %p96 = scmp.ne.s32.totalorder %s87, %s88
      %p97 = scmp.eq.s32.totalorder %s30, 0
      %p98 = por %p96, %p97
      %p99 = scmp.ne.s32.totalorder %s87, %s88
      %p100 = scmp.eq.s32.totalorder %s31, 1
      %p101 = por %p99, %p100
      %p103 = scmp.ne.s32.totalorder %s88, %s102
      %p104 = scmp.eq.s32.totalorder %s31, 0
      %p105 = por %p103, %p104
      %s107 = sadd.s32 %s106, 1
      %p110 = scmp.eq.s32.totalorder %s25, 1
      %p111 = scmp.ne.s32.totalorder %s106, %s108
      %p112 = scmp.eq.s32.totalorder %s25, 0
      %p113 = por %p111, %p112
      %p114 = scmp.ne.s32.totalorder %s106, %s108
      %p115 = scmp.eq.s32.totalorder %s30, 1
      %p116 = por %p114, %p115
      %p117 = scmp.ne.s32.totalorder %s108, %s109
      %p118 = scmp.eq.s32.totalorder %s30, 0
      %p119 = por %p117, %p118
      %p120 = scmp.ne.s32.totalorder %s108, %s109
      %p121 = scmp.eq.s32.totalorder %s31, 1
      %p122 = por %p120, %p121
      %p124 = scmp.ne.s32.totalorder %s109, %s123
      %p125 = scmp.eq.s32.totalorder %s31, 0
      %p126 = por %p124, %p125
      %s128 = sadd.s32 %s127, 1
      %p131 = scmp.eq.s32.totalorder %s25, 1
      %p132 = scmp.ne.s32.totalorder %s127, %s129
      %p133 = scmp.eq.s32.totalorder %s25, 0
      %p134 = por %p132, %p133
      %p135 = scmp.ne.s32.totalorder %s127, %s129
      %p136 = scmp.eq.s32.totalorder %s30, 1
      %p137 = por %p135, %p136
      %p138 = scmp.ne.s32.totalorder %s129, %s130
      %p139 = scmp.eq.s32.totalorder %s30, 0
      %p140 = por %p138, %p139
      %p141 = scmp.ne.s32.totalorder %s129, %s130
      %p142 = scmp.eq.s32.totalorder %s31, 1
      %p143 = por %p141, %p142
      %p145 = scmp.ne.s32.totalorder %s130, %s144
      %p146 = scmp.eq.s32.totalorder %s31, 0
      %p147 = por %p145, %p146
      %s149 = sadd.s32 %s148, 1
      %p152 = scmp.eq.s32.totalorder %s25, 1
      %p153 = scmp.ne.s32.totalorder %s148, %s150
      %p154 = scmp.eq.s32.totalorder %s25, 0
      %p155 = por %p153, %p154
      %p156 = scmp.ne.s32.totalorder %s148, %s150
      %p157 = scmp.eq.s32.totalorder %s30, 1
      %p158 = por %p156, %p157
      %p159 = scmp.ne.s32.totalorder %s150, %s151
      %p160 = scmp.eq.s32.totalorder %s30, 0
      %p161 = por %p159, %p160
      %p162 = scmp.ne.s32.totalorder %s150, %s151
      %p163 = scmp.eq.s32.totalorder %s31, 1
      %p164 = por %p162, %p163
      %p166 = scmp.ne.s32.totalorder %s151, %s165
      %p167 = scmp.eq.s32.totalorder %s31, 0
      %p168 = por %p166, %p167
      %s170 = sadd.s32 %s169, 1
      %p173 = scmp.eq.s32.totalorder %s25, 1
      %p174 = scmp.ne.s32.totalorder %s169, %s171
      %p175 = scmp.eq.s32.totalorder %s25, 0
      %p176 = por %p174, %p175
      %p177 = scmp.ne.s32.totalorder %s169, %s171
      %p178 = scmp.eq.s32.totalorder %s30, 1
      %p179 = por %p177, %p178
      %p180 = scmp.ne.s32.totalorder %s171, %s172
      %p181 = scmp.eq.s32.totalorder %s30, 0
      %p182 = por %p180, %p181
      %p183 = scmp.ne.s32.totalorder %s171, %s172
      %p184 = scmp.eq.s32.totalorder %s31, 1
      %p185 = por %p183, %p184
      %p187 = scmp.ne.s32.totalorder %s172, %s186
      %p188 = scmp.eq.s32.totalorder %s31, 0
      %p189 = por %p187, %p188
      %s191 = sadd.s32 %s190, 1
      %p194 = scmp.eq.s32.totalorder %s25, 1
      %p195 = scmp.ne.s32.totalorder %s190, %s192
      %p196 = scmp.eq.s32.totalorder %s25, 0
      %p197 = por %p195, %p196
      %p198 = scmp.ne.s32.totalorder %s190, %s192
      %p199 = scmp.eq.s32.totalorder %s30, 1
      %p200 = por %p198, %p199
      %p201 = scmp.ne.s32.totalorder %s192, %s193
      %p202 = scmp.eq.s32.totalorder %s30, 0
      %p203 = por %p201, %p202
      %p204 = scmp.ne.s32.totalorder %s192, %s193
      %p205 = scmp.eq.s32.totalorder %s31, 1
      %p206 = por %p204, %p205
      %p208 = scmp.ne.s32.totalorder %s193, %s207
      %p209 = scmp.eq.s32.totalorder %s31, 0
      %p210 = por %p208, %p209
      %s212 = sadd.s32 %s211, 1
      %p215 = scmp.eq.s32.totalorder %s25, 1
      %p216 = scmp.ne.s32.totalorder %s211, %s213
      %p217 = scmp.eq.s32.totalorder %s25, 0
      %p218 = por %p216, %p217
      %p219 = scmp.ne.s32.totalorder %s211, %s213
      %p220 = scmp.eq.s32.totalorder %s30, 1
      %p221 = por %p219, %p220
      %p222 = scmp.ne.s32.totalorder %s213, %s214
      %p223 = scmp.eq.s32.totalorder %s30, 0
      %p224 = por %p222, %p223
      %p225 = scmp.ne.s32.totalorder %s213, %s214
      %p226 = scmp.eq.s32.totalorder %s31, 1
      %p227 = por %p225, %p226
      %p229 = scmp.ne.s32.totalorder %s214, %s228
      %p230 = scmp.eq.s32.totalorder %s31, 0
      %p231 = por %p229, %p230
      %s232 = ssub.s32 %s25, %s32
      %p233 = scmp.eq.s32.totalorder %s232, 0
      %s235 = sadd.s32 %s234, 1
      %s236 = scalar_select %p233, %s234, %s235
      %p239 = pneg %p233
      %p240 = scmp.eq.s32.totalorder %s25, 1
      %p241 = por %p239, %p240
      %p242 = scmp.ne.s32.totalorder %s234, %s237
      %p243 = scmp.eq.s32.totalorder %s25, 0
      %p244 = por %p242, %p243
      %p245 = scmp.ne.s32.totalorder %s234, %s237
      %p246 = scmp.eq.s32.totalorder %s30, 1
      %p247 = por %p245, %p246
      %p248 = scmp.ne.s32.totalorder %s237, %s238
      %p249 = scmp.eq.s32.totalorder %s30, 0
      %p250 = por %p248, %p249
      %p251 = scmp.ne.s32.totalorder %s237, %s238
      %p252 = scmp.eq.s32.totalorder %s31, 1
      %p253 = por %p251, %p252
      %p255 = scmp.ne.s32.totalorder %s238, %s254
      %p256 = scmp.eq.s32.totalorder %s31, 0
      %p257 = por %p255, %p256
      %p258 = scmp.le.s32.totalorder 1, %s25
      %p259 = scmp.lt.s32.totalorder %s25, 3
      %p260 = pnand %p258, %p259
      %p261 = pneg %p260
      // Predicated region
      $region9: #{transformer_encoder_layer.1} parent=5 // pred_check
        _
      $region10: #{transformer_encoder_layer.1} parent=5 // pred_check_branch
        %263 = sbr.rel (%p260) target = $region12
      $region11: #{transformer_encoder_layer.1} parent=5 // pred_region
        %s264 = ssub.s32 %s25, 1
        // Predicated region
        $region13: #{transformer_encoder_layer.1} parent=11 // pred_check
          %p265 = pneg %p98
        $region14: #{transformer_encoder_layer.1} parent=11 // pred_check_branch
          %267 = sbr.rel (%p265) target = $region16
        $region15: #{transformer_encoder_layer.1} parent=11 // pred_region
          _
        $region16: #{transformer_encoder_layer.1} parent=11 // pred_fallthru
          _
        // Predicated region
        $region17: #{transformer_encoder_layer.1} parent=11 // pred_check
          %p268 = pneg %p119
        $region18: #{transformer_encoder_layer.1} parent=11 // pred_check_branch
          %270 = sbr.rel (%p268) target = $region20
        $region19: #{transformer_encoder_layer.1} parent=11 // pred_region
          _
        $region20: #{transformer_encoder_layer.1} parent=11 // pred_fallthru
          _
        // Predicated region
        $region21: #{transformer_encoder_layer.1} parent=11 // pred_check
          %p271 = pneg %p140
        $region22: #{transformer_encoder_layer.1} parent=11 // pred_check_branch
          %273 = sbr.rel (%p271) target = $region24
        $region23: #{transformer_encoder_layer.1} parent=11 // pred_region
          _
        $region24: #{transformer_encoder_layer.1} parent=11 // pred_fallthru
          _
        // Predicated region
        $region25: #{transformer_encoder_layer.1} parent=11 // pred_check
          %p274 = pneg %p161
        $region26: #{transformer_encoder_layer.1} parent=11 // pred_check_branch
          %276 = sbr.rel (%p274) target = $region28
        $region27: #{transformer_encoder_layer.1} parent=11 // pred_region
          %278 = vsyncadd [#allocation6], 0
          %s279 = sshll.u32 %s5, 4
          %s280 = int_to_ptr.hbm [resolvable:$true] %s279
          %s281 = sshll.u32 [#allocation7], 4
          %s282 = int_to_ptr.vmem [resolvable:$true] %s281
          %287 = dma.hbm_to_vmem [thread:$0]  %s280, 512, %s282, [#allocation6], 128, 128, 8
        $region28: #{transformer_encoder_layer.1} parent=11 // pred_fallthru
          _
        // Predicated region
        $region29: #{transformer_encoder_layer.1} parent=11 // pred_check
          %p288 = pneg %p182
        $region30: #{transformer_encoder_layer.1} parent=11 // pred_check_branch
          %290 = sbr.rel (%p288) target = $region32
        $region31: #{transformer_encoder_layer.1} parent=11 // pred_region
          _
        $region32: #{transformer_encoder_layer.1} parent=11 // pred_fallthru
          _
        // Predicated region
        $region33: #{transformer_encoder_layer.1} parent=11 // pred_check
          %p291 = pneg %p203
        $region34: #{transformer_encoder_layer.1} parent=11 // pred_check_branch
          %293 = sbr.rel (%p291) target = $region36
        $region35: #{transformer_encoder_layer.1} parent=11 // pred_region
          %295 = vsyncadd [#allocation9], 0
          %s297 = sshll.u32 %s7, 4
          %s298 = int_to_ptr.hbm [resolvable:$true] %s297
          %s299 = sshll.u32 [#allocation8], 4
          %s300 = int_to_ptr.vmem [resolvable:$true] %s299
          %302 = dma.hbm_to_vmem [thread:$0]  %s298, 128, %s300, [#allocation9]
        $region36: #{transformer_encoder_layer.1} parent=11 // pred_fallthru
          _
        // Predicated region
        $region37: #{transformer_encoder_layer.1} parent=11 // pred_check
          %p303 = pneg %p224
        $region38: #{transformer_encoder_layer.1} parent=11 // pred_check_branch
          %305 = sbr.rel (%p303) target = $region40
        $region39: #{transformer_encoder_layer.1} parent=11 // pred_region
          %307 = vsyncadd [#allocation9], 0
          %s309 = sshll.u32 %s8, 4
          %s310 = int_to_ptr.hbm [resolvable:$true] %s309
          %s311 = sshll.u32 [#allocation10], 4
          %s312 = int_to_ptr.vmem [resolvable:$true] %s311
          %314 = dma.hbm_to_vmem [thread:$0]  %s310, 32, %s312, [#allocation9]
        $region40: #{transformer_encoder_layer.1} parent=11 // pred_fallthru
          _
      $region12: #{transformer_encoder_layer.1} parent=5 // pred_fallthru
        _
      %p315 = scmp.lt.s32.totalorder %s25, 2
      // Predicated region
      $region41: #{transformer_encoder_layer.1} parent=5 // pred_check
        %p316 = pneg %p315
      $region42: #{transformer_encoder_layer.1} parent=5 // pred_check_branch
        %318 = sbr.rel (%p316) target = $region44
      $region43: #{transformer_encoder_layer.1} parent=5 // pred_region
        // Predicated region
        $region45: #{transformer_encoder_layer.1} parent=43 // pred_check
          %p319 = pneg %p45
        $region46: #{transformer_encoder_layer.1} parent=43 // pred_check_branch
          %321 = sbr.rel (%p319) target = $region48
        $region47: #{transformer_encoder_layer.1} parent=43 // pred_region
          %s322 = sand.u32 %s35, 1
          %s323 = scalar_lea.sflag [#allocation3], %s322
          %s324 = sand.u32 %s35, 1
          %s325 = smul.addr %s324, 8
          %s326 = scalar_lea.vmem [#allocation2], %s325
          %328 = vsyncadd %s323, 0
          %s329 = smul.addr %s25, 8
          %s330 = scalar_lea.hbm %s0, %s329
          %s332 = sshll.u32 %s330, 4
          %s333 = int_to_ptr.hbm [resolvable:$true] %s332
          %s334 = sshll.u32 %s326, 4
          %s335 = int_to_ptr.vmem [resolvable:$true] %s334
          %337 = dma.hbm_to_vmem [thread:$0]  %s333, 128, %s335, %s323
        $region48: #{transformer_encoder_layer.1} parent=43 // pred_fallthru
          _
        // Predicated region
        $region49: #{transformer_encoder_layer.1} parent=43 // pred_check
          %p338 = pneg %p71
        $region50: #{transformer_encoder_layer.1} parent=43 // pred_check_branch
          %340 = sbr.rel (%p338) target = $region52
        $region51: #{transformer_encoder_layer.1} parent=43 // pred_region
          %s341 = sand.u32 %s25, 1
          %s342 = scalar_lea.sflag [#allocation6], %s341
          %s343 = sand.u32 %s61, 1
          %s344 = smul.addr %s343, 8
          %s345 = scalar_lea.vmem [#allocation5], %s344
          %347 = vsyncadd %s342, 0
          %s348 = smul.addr %s25, 8
          %s349 = scalar_lea.hbm %s1, %s348
          %s351 = sshll.u32 %s349, 4
          %s352 = int_to_ptr.hbm [resolvable:$true] %s351
          %s353 = sshll.u32 %s345, 4
          %s354 = int_to_ptr.vmem [resolvable:$true] %s353
          %356 = dma.hbm_to_vmem [thread:$0]  %s352, 128, %s354, %s342
        $region52: #{transformer_encoder_layer.1} parent=43 // pred_fallthru
          _
      $region44: #{transformer_encoder_layer.1} parent=5 // pred_fallthru
        _
      %p357 = scmp.le.s32.totalorder 1, %s25
      %p358 = scmp.lt.s32.totalorder %s25, 3
      %p359 = pnand %p357, %p358
      %p360 = pneg %p359
      // Predicated region
      $region53: #{transformer_encoder_layer.1} parent=5 // pred_check
        _
      $region54: #{transformer_encoder_layer.1} parent=5 // pred_check_branch
        %362 = sbr.rel (%p359) target = $region56
      $region55: #{transformer_encoder_layer.1} parent=5 // pred_region
        %s363 = ssub.s32 %s25, 1
        %s364 = sand.u32 %s38, 1
        %s365 = scalar_lea.sflag [#allocation3], %s364
        %s366 = sand.u32 %s38, 1
        %s367 = smul.addr %s366, 8
        %s368 = scalar_lea.vmem [#allocation2], %s367
        // Predicated region
        $region57: #{transformer_encoder_layer.1} parent=55 // pred_check
          %p369 = pneg %p51
        $region58: #{transformer_encoder_layer.1} parent=55 // pred_check_branch
          %371 = sbr.rel (%p369) target = $region60
        $region59: #{transformer_encoder_layer.1} parent=55 // pred_region
          %373 = dma.done %s365, 128
        $region60: #{transformer_encoder_layer.1} parent=55 // pred_fallthru
          _
        %s374 = sand.u32 %s30, 1
        %s375 = scalar_lea.sflag [#allocation6], %s374
        %s376 = sand.u32 %s64, 1
        %s377 = smul.addr %s376, 8
        %s378 = scalar_lea.vmem [#allocation5], %s377
        // Predicated region
        $region61: #{transformer_encoder_layer.1} parent=55 // pred_check
          %p379 = pneg %p77
        $region62: #{transformer_encoder_layer.1} parent=55 // pred_check_branch
          %381 = sbr.rel (%p379) target = $region64
        $region63: #{transformer_encoder_layer.1} parent=55 // pred_region
          %383 = dma.done %s375, 128
        $region64: #{transformer_encoder_layer.1} parent=55 // pred_fallthru
          _
        // Predicated region
        $region65: #{transformer_encoder_layer.1} parent=55 // pred_check
          %p384 = pneg %p161
        $region66: #{transformer_encoder_layer.1} parent=55 // pred_check_branch
          %386 = sbr.rel (%p384) target = $region68
        $region67: #{transformer_encoder_layer.1} parent=55 // pred_region
          %388 = dma.done [#allocation6], 512
        $region68: #{transformer_encoder_layer.1} parent=55 // pred_fallthru
          _
        // Predicated region
        $region69: #{transformer_encoder_layer.1} parent=55 // pred_check
          %p389 = pneg %p203
        $region70: #{transformer_encoder_layer.1} parent=55 // pred_check_branch
          %391 = sbr.rel (%p389) target = $region72
        $region71: #{transformer_encoder_layer.1} parent=55 // pred_region
          %393 = dma.done [#allocation9], 128
        $region72: #{transformer_encoder_layer.1} parent=55 // pred_fallthru
          _
        // Predicated region
        $region73: #{transformer_encoder_layer.1} parent=55 // pred_check
          %p394 = pneg %p224
        $region74: #{transformer_encoder_layer.1} parent=55 // pred_check_branch
          %396 = sbr.rel (%p394) target = $region76
        $region75: #{transformer_encoder_layer.1} parent=55 // pred_region
          %398 = dma.done [#allocation9], 32
        $region76: #{transformer_encoder_layer.1} parent=55 // pred_fallthru
          _
        %s399 = sand.u32 %s38, 1
        %s400 = scalar_lea.sflag [#allocation3], %s399
        %s401 = sand.u32 %s38, 1
        %s402 = smul.addr %s401, 8
        %s403 = scalar_lea.vmem [#allocation2], %s402
        %p404 = pneg %p51
        %p405 = pneg %p48
        %s406 = sand.u32 %s30, 1
        %s407 = scalar_lea.sflag [#allocation6], %s406
        %s408 = sand.u32 %s64, 1
        %s409 = smul.addr %s408, 8
        %s410 = scalar_lea.vmem [#allocation5], %s409
        %p411 = pneg %p77
        %p412 = pneg %p74
        %p413 = pneg %p98
        %p414 = pneg %p95
        %p415 = pneg %p119
        %p416 = pneg %p116
        %p417 = pneg %p140
        %p418 = pneg %p137
        %p419 = pneg %p161
        %p420 = pneg %p158
        %p421 = pneg %p182
        %p422 = pneg %p179
        %p423 = pneg %p203
        %p424 = pneg %p200
        %p425 = pneg %p224
        %p426 = pneg %p221
        %p427 = pneg %p250
        %p428 = pneg %p247
        %s429 = sand.u32 %s237, 1
        %s430 = scalar_lea.sflag [#allocation4], %s429
        %s431 = sand.u32 %s237, 1
        %s432 = smul.addr %s431, 8
        %s433 = scalar_lea.vmem [#allocation11], %s432
        %v434 = vld [vmem:[%s368] sm:$0xff]
        %v435 = vld [vmem:[%s378] sm:$0xff]
        %v436 = vadd.f32 %v434, %v435
        %v437 = vld [vmem:[#allocation8] sm:$0x1]
        %v438 = vld [vmem:[#allocation8 + $0x1] sm:$0x1]
        %v439 = vld [vmem:[#allocation8 + $0x2] sm:$0x1]
        %v440 = vld [vmem:[#allocation8 + $0x3] sm:$0x1]
        %v441 = vld [vmem:[#allocation8 + $0x4] sm:$0x1]
        %v442 = vld [vmem:[#allocation8 + $0x5] sm:$0x1]
        %v443 = vld [vmem:[#allocation8 + $0x6] sm:$0x1]
        %v444 = vld [vmem:[#allocation10] sm:$0x1]
        %v445 = vld [vmem:[#allocation10 + $0x1] sm:$0x1]
        %v446 = vld [vmem:[%s2] sm:$0xff]
        %v447 = vld [vmem:[%s2 + $0x8] sm:$0xff]
        %v448 = vld [vmem:[%s2 + $0x10] sm:$0xff]
        %v449 = vld [vmem:[%s2 + $0x18] sm:$0xff]
        %v450 = vperm.slane %v444, 0
        %vm451 = vcmask 261120
        %v453 = vsel %vm451, %v436, 0
        %455 = vmatpush.msra.mxu0 0.0
        %456 = vmatpush.msra.mxu0 0.0
        %457 = vmatpush.msra.mxu0 0.0
        %458 = vmatpush.msra.mxu0 0.0
        %459 = vmatpush.msra.mxu0 0.0
        %460 = vmatpush.msra.mxu0 0.0
        %461 = vmatpush.msra.mxu0 0.0
        %462 = vmatpush.msra.mxu0 0.0
        %463 = vmatpush.msra.mxu0 0.0
        %464 = vmatpush.msra.mxu0 0.0
        %465 = vmatpush.msra.mxu0 0.0
        %466 = vmatpush.msra.mxu0 0.0
        %467 = vmatpush.msra.mxu0 %v449
        %468 = vmatpush.msra.mxu0 %v448
        %469 = vmatpush.msra.mxu0 %v447
        %470 = vmatpush.msra.mxu0 %v446
        %471 = vmatmul.f32.gmra.mxu0 %v453
        %v472 = vpop.f32.mrf.mxu0
        %v473 = vadd.f32 %v450, %v472
        %474 = vdwg.mxu0
        %v475 = vld [vmem:[%s3] sm:$0xff]
        %v476 = vld [vmem:[%s3 + $0x8] sm:$0xff]
        %v477 = vld [vmem:[%s3 + $0x10] sm:$0xff]
        %v478 = vld [vmem:[%s3 + $0x18] sm:$0xff]
        %v479 = vperm.slane %v437, 0
        %v481 = vsel %vm451, %v434, 0
        %483 = vmatpush.msra.mxu0 0.0
        %484 = vmatpush.msra.mxu0 0.0
        %485 = vmatpush.msra.mxu0 0.0
        %486 = vmatpush.msra.mxu0 0.0
        %487 = vmatpush.msra.mxu0 0.0
        %488 = vmatpush.msra.mxu0 0.0
        %489 = vmatpush.msra.mxu0 0.0
        %490 = vmatpush.msra.mxu0 0.0
        %491 = vmatpush.msra.mxu0 0.0
        %492 = vmatpush.msra.mxu0 0.0
        %493 = vmatpush.msra.mxu0 0.0
        %494 = vmatpush.msra.mxu0 0.0
        %495 = vmatpush.msra.mxu0 %v478
        %496 = vmatpush.msra.mxu0 %v477
        %497 = vmatpush.msra.mxu0 %v476
        %498 = vmatpush.msra.mxu0 %v475
        %499 = vmatmul.f32.gmra.mxu0 %v481
        %v500 = vpop.f32.mrf.mxu0
        %v501 = vadd.f32 %v479, %v500
        %502 = vdwg.mxu0
        %504 = vrot.lane.b32.xlu0 %v473, 96
        %v505 = vpop.permute.xlu0 %504
        %vm506 = vcmask 64512
        %v507 = vsel %vm506, %v473, 0
        %v509 = vsel %vm506, %v505, 0
        %511 = vmatpush.xpose.msra.mxu0 0.0
        %512 = vmatpush.xpose.msra.mxu0 0.0
        %513 = vmatpush.xpose.msra.mxu0 0.0
        %514 = vmatpush.xpose.msra.mxu0 0.0
        %515 = vmatpush.xpose.msra.mxu0 0.0
        %516 = vmatpush.xpose.msra.mxu0 0.0
        %517 = vmatpush.xpose.msra.mxu0 0.0
        %518 = vmatpush.xpose.msra.mxu0 0.0
        %519 = vmatpush.xpose.msra.mxu0 0.0
        %520 = vmatpush.xpose.msra.mxu0 0.0
        %521 = vmatpush.xpose.msra.mxu0 0.0
        %522 = vmatpush.xpose.msra.mxu0 0.0
        %523 = vmatpush.xpose.msra.mxu0 0.0
        %524 = vmatpush.xpose.msra.mxu0 0.0
        %525 = vmatpush.xpose.msra.mxu0 0.0
        %526 = vmatpush.xpose.msra.mxu0 %v509
        %527 = vmatmul.f32.gmra.mxu0 %v507
        %v528 = vpop.f32.mrf.mxu0
        %v529 = vadd.f32 0.0, %v528
        %530 = vdwg.mxu0
        %v531 = vsel %vm506, %v529, -inf
        %532 = vmax.xlane.f32.xlu0 %v531
        %v533 = vpop.xlane.xlu0 %532
        %v534 = vsub.f32 %v529, %v533
        %v535 = vmul.f32 %v534, 1.442695
        %v536 = vpow.pop %v535
        %v537 = vsel %vm506, %v536, 0.0
        %538 = vadd.xlane.f32.xlu0 %v537
        %v539 = vpop.xlane.xlu0 %538
        %v540 = vrcp.pop %v539
        %v541 = vmul.f32 %v539, %v540
        %v542 = vsub.f32 1.0, %v541
        %v543 = vmul.f32 %v540, %v542
        %v544 = vadd.f32 %v540, %v543
        %vm545 = vweird.f32 %v539
        %vm546 = vweird.f32 %v540
        %vm547 = vmor %vm545, %vm546
        %v548 = vsel %vm547, %v540, %v544
        %v549 = vand.u32 2147483647, %v539
        %vm550 = vcmp.eq.f32.partialorder %v549, 8.507059e+37
        %v551 = vand.u32 %v539, 2147483648
        %v552 = vor.u32 1.1754944e-38, %v551
        %v553 = vsel %vm550, %v552, %v548
        %v554 = vmul.f32 %v536, %v553
        %v556 = vsel %vm506, %v554, 0
        %558 = vmatpush.msra.mxu0 0.0
        %559 = vmatpush.msra.mxu0 0.0
        %560 = vmatpush.msra.mxu0 0.0
        %561 = vmatpush.msra.mxu0 0.0
        %562 = vmatpush.msra.mxu0 0.0
        %563 = vmatpush.msra.mxu0 0.0
        %564 = vmatpush.msra.mxu0 0.0
        %565 = vmatpush.msra.mxu0 0.0
        %566 = vmatpush.msra.mxu0 0.0
        %567 = vmatpush.msra.mxu0 0.0
        %568 = vmatpush.msra.mxu0 0.0
        %569 = vmatpush.msra.mxu0 0.0
        %570 = vmatpush.msra.mxu0 0.0
        %571 = vmatpush.msra.mxu0 0.0
        %572 = vmatpush.msra.mxu0 0.0
        %573 = vmatpush.msra.mxu0 %v501
        %574 = vmatmul.f32.gmra.mxu0 %v556
        %v575 = vpop.f32.mrf.mxu0
        %v576 = vadd.f32 0.0, %v575
        %577 = vdwg.mxu0
        %578 = vrot.lane.b32.xlu0 %v473, 120
        %v579 = vpop.permute.xlu0 %578
        %580 = vrot.lane.b32.xlu0 %v473, 88
        %v581 = vpop.permute.xlu0 %580
        %v582 = vsel %vm506, %v579, 0
        %v584 = vsel %vm506, %v581, 0
        %586 = vmatpush.xpose.msra.mxu0 0.0
        %587 = vmatpush.xpose.msra.mxu0 0.0
        %588 = vmatpush.xpose.msra.mxu0 0.0
        %589 = vmatpush.xpose.msra.mxu0 0.0
        %590 = vmatpush.xpose.msra.mxu0 0.0
        %591 = vmatpush.xpose.msra.mxu0 0.0
        %592 = vmatpush.xpose.msra.mxu0 0.0
        %593 = vmatpush.xpose.msra.mxu0 0.0
        %594 = vmatpush.xpose.msra.mxu0 0.0
        %595 = vmatpush.xpose.msra.mxu0 0.0
        %596 = vmatpush.xpose.msra.mxu0 0.0
        %597 = vmatpush.xpose.msra.mxu0 0.0
        %598 = vmatpush.xpose.msra.mxu0 0.0
        %599 = vmatpush.xpose.msra.mxu0 0.0
        %600 = vmatpush.xpose.msra.mxu0 0.0
        %601 = vmatpush.xpose.msra.mxu0 %v584
        %602 = vmatmul.f32.gmra.mxu0 %v582
        %v603 = vpop.f32.mrf.mxu0
        %v604 = vadd.f32 0.0, %v603
        %605 = vdwg.mxu0
        %v606 = vsel %vm506, %v604, -inf
        %607 = vmax.xlane.f32.xlu0 %v606
        %v608 = vpop.xlane.xlu0 %607
        %v609 = vsub.f32 %v604, %v608
        %v610 = vmul.f32 %v609, 1.442695
        %v611 = vpow.pop %v610
        %v612 = vsel %vm506, %v611, 0.0
        %613 = vadd.xlane.f32.xlu0 %v612
        %v614 = vpop.xlane.xlu0 %613
        %v615 = vrcp.pop %v614
        %v616 = vmul.f32 %v614, %v615
        %v617 = vsub.f32 1.0, %v616
        %v618 = vmul.f32 %v615, %v617
        %v619 = vadd.f32 %v615, %v618
        %vm620 = vweird.f32 %v614
        %vm621 = vweird.f32 %v615
        %vm622 = vmor %vm620, %vm621
        %v623 = vsel %vm622, %v615, %v619
        %v624 = vand.u32 2147483647, %v614
        %vm625 = vcmp.eq.f32.partialorder %v624, 8.507059e+37
        %v626 = vand.u32 %v614, 2147483648
        %v627 = vor.u32 1.1754944e-38, %v626
        %v628 = vsel %vm625, %v627, %v623
        %v629 = vmul.f32 %v611, %v628
        %631 = vrot.lane.b32.xlu0 %v501, 120
        %v632 = vpop.permute.xlu0 %631
        %v635 = vsel %vm506, %v629, 0
        %637 = vmatpush.msra.mxu0 0.0
        %638 = vmatpush.msra.mxu0 0.0
        %639 = vmatpush.msra.mxu0 0.0
        %640 = vmatpush.msra.mxu0 0.0
        %641 = vmatpush.msra.mxu0 0.0
        %642 = vmatpush.msra.mxu0 0.0
        %643 = vmatpush.msra.mxu0 0.0
        %644 = vmatpush.msra.mxu0 0.0
        %645 = vmatpush.msra.mxu0 0.0
        %646 = vmatpush.msra.mxu0 0.0
        %647 = vmatpush.msra.mxu0 0.0
        %648 = vmatpush.msra.mxu0 0.0
        %649 = vmatpush.msra.mxu0 0.0
        %650 = vmatpush.msra.mxu0 0.0
        %651 = vmatpush.msra.mxu0 0.0
        %652 = vmatpush.msra.mxu0 %v632
        %653 = vmatmul.f32.gmra.mxu0 %v635
        %v654 = vpop.f32.mrf.mxu0
        %v655 = vadd.f32 0.0, %v654
        %656 = vdwg.mxu0
        %657 = vrot.lane.b32.xlu0 %v473, 112
        %v658 = vpop.permute.xlu0 %657
        %659 = vrot.lane.b32.xlu0 %v473, 80
        %v660 = vpop.permute.xlu0 %659
        %v661 = vsel %vm506, %v658, 0
        %v663 = vsel %vm506, %v660, 0
        %665 = vmatpush.xpose.msra.mxu0 0.0
        %666 = vmatpush.xpose.msra.mxu0 0.0
        %667 = vmatpush.xpose.msra.mxu0 0.0
        %668 = vmatpush.xpose.msra.mxu0 0.0
        %669 = vmatpush.xpose.msra.mxu0 0.0
        %670 = vmatpush.xpose.msra.mxu0 0.0
        %671 = vmatpush.xpose.msra.mxu0 0.0
        %672 = vmatpush.xpose.msra.mxu0 0.0
        %673 = vmatpush.xpose.msra.mxu0 0.0
        %674 = vmatpush.xpose.msra.mxu0 0.0
        %675 = vmatpush.xpose.msra.mxu0 0.0
        %676 = vmatpush.xpose.msra.mxu0 0.0
        %677 = vmatpush.xpose.msra.mxu0 0.0
        %678 = vmatpush.xpose.msra.mxu0 0.0
        %679 = vmatpush.xpose.msra.mxu0 0.0
        %680 = vmatpush.xpose.msra.mxu0 %v663
        %681 = vmatmul.f32.gmra.mxu0 %v661
        %v682 = vpop.f32.mrf.mxu0
        %v683 = vadd.f32 0.0, %v682
        %684 = vdwg.mxu0
        %v685 = vsel %vm506, %v683, -inf
        %686 = vmax.xlane.f32.xlu0 %v685
        %v687 = vpop.xlane.xlu0 %686
        %v688 = vsub.f32 %v683, %v687
        %v689 = vmul.f32 %v688, 1.442695
        %v690 = vpow.pop %v689
        %v691 = vsel %vm506, %v690, 0.0
        %692 = vadd.xlane.f32.xlu0 %v691
        %v693 = vpop.xlane.xlu0 %692
        %v694 = vrcp.pop %v693
        %v695 = vmul.f32 %v693, %v694
        %v696 = vsub.f32 1.0, %v695
        %v697 = vmul.f32 %v694, %v696
        %v698 = vadd.f32 %v694, %v697
        %vm699 = vweird.f32 %v693
        %vm700 = vweird.f32 %v694
        %vm701 = vmor %vm699, %vm700
        %v702 = vsel %vm701, %v694, %v698
        %v703 = vand.u32 2147483647, %v693
        %vm704 = vcmp.eq.f32.partialorder %v703, 8.507059e+37
        %v705 = vand.u32 %v693, 2147483648
        %v706 = vor.u32 1.1754944e-38, %v705
        %v707 = vsel %vm704, %v706, %v702
        %v708 = vmul.f32 %v690, %v707
        %709 = vrot.lane.b32.xlu0 %v501, 112
        %v710 = vpop.permute.xlu0 %709
        %v713 = vsel %vm506, %v708, 0
        %715 = vmatpush.msra.mxu0 0.0
        %716 = vmatpush.msra.mxu0 0.0
        %717 = vmatpush.msra.mxu0 0.0
        %718 = vmatpush.msra.mxu0 0.0
        %719 = vmatpush.msra.mxu0 0.0
        %720 = vmatpush.msra.mxu0 0.0
        %721 = vmatpush.msra.mxu0 0.0
        %722 = vmatpush.msra.mxu0 0.0
        %723 = vmatpush.msra.mxu0 0.0
        %724 = vmatpush.msra.mxu0 0.0
        %725 = vmatpush.msra.mxu0 0.0
        %726 = vmatpush.msra.mxu0 0.0
        %727 = vmatpush.msra.mxu0 0.0
        %728 = vmatpush.msra.mxu0 0.0
        %729 = vmatpush.msra.mxu0 0.0
        %730 = vmatpush.msra.mxu0 %v710
        %731 = vmatmul.f32.gmra.mxu0 %v713
        %v732 = vpop.f32.mrf.mxu0
        %v733 = vadd.f32 0.0, %v732
        %734 = vdwg.mxu0
        %735 = vrot.lane.b32.xlu0 %v473, 104
        %v736 = vpop.permute.xlu0 %735
        %737 = vrot.lane.b32.xlu0 %v473, 72
        %v738 = vpop.permute.xlu0 %737
        %v739 = vsel %vm506, %v736, 0
        %v741 = vsel %vm506, %v738, 0
        %743 = vmatpush.xpose.msra.mxu0 0.0
        %744 = vmatpush.xpose.msra.mxu0 0.0
        %745 = vmatpush.xpose.msra.mxu0 0.0
        %746 = vmatpush.xpose.msra.mxu0 0.0
        %747 = vmatpush.xpose.msra.mxu0 0.0
        %748 = vmatpush.xpose.msra.mxu0 0.0
        %749 = vmatpush.xpose.msra.mxu0 0.0
        %750 = vmatpush.xpose.msra.mxu0 0.0
        %751 = vmatpush.xpose.msra.mxu0 0.0
        %752 = vmatpush.xpose.msra.mxu0 0.0
        %753 = vmatpush.xpose.msra.mxu0 0.0
        %754 = vmatpush.xpose.msra.mxu0 0.0
        %755 = vmatpush.xpose.msra.mxu0 0.0
        %756 = vmatpush.xpose.msra.mxu0 0.0
        %757 = vmatpush.xpose.msra.mxu0 0.0
        %758 = vmatpush.xpose.msra.mxu0 %v741
        %759 = vmatmul.f32.gmra.mxu0 %v739
        %v760 = vpop.f32.mrf.mxu0
        %v761 = vadd.f32 0.0, %v760
        %762 = vdwg.mxu0
        %v763 = vsel %vm506, %v761, -inf
        %764 = vmax.xlane.f32.xlu0 %v763
        %v765 = vpop.xlane.xlu0 %764
        %v766 = vsub.f32 %v761, %v765
        %v767 = vmul.f32 %v766, 1.442695
        %v768 = vpow.pop %v767
        %v769 = vsel %vm506, %v768, 0.0
        %770 = vadd.xlane.f32.xlu0 %v769
        %v771 = vpop.xlane.xlu0 %770
        %v772 = vrcp.pop %v771
        %v773 = vmul.f32 %v771, %v772
        %v774 = vsub.f32 1.0, %v773
        %v775 = vmul.f32 %v772, %v774
        %v776 = vadd.f32 %v772, %v775
        %vm777 = vweird.f32 %v771
        %vm778 = vweird.f32 %v772
        %vm779 = vmor %vm777, %vm778
        %v780 = vsel %vm779, %v772, %v776
        %v781 = vand.u32 2147483647, %v771
        %vm782 = vcmp.eq.f32.partialorder %v781, 8.507059e+37
        %v783 = vand.u32 %v771, 2147483648
        %v784 = vor.u32 1.1754944e-38, %v783
        %v785 = vsel %vm782, %v784, %v780
        %v786 = vmul.f32 %v768, %v785
        %787 = vrot.lane.b32.xlu0 %v501, 104
        %v788 = vpop.permute.xlu0 %787
        %v791 = vsel %vm506, %v786, 0
        %793 = vmatpush.msra.mxu0 0.0
        %794 = vmatpush.msra.mxu0 0.0
        %795 = vmatpush.msra.mxu0 0.0
        %796 = vmatpush.msra.mxu0 0.0
        %797 = vmatpush.msra.mxu0 0.0
        %798 = vmatpush.msra.mxu0 0.0
        %799 = vmatpush.msra.mxu0 0.0
        %800 = vmatpush.msra.mxu0 0.0
        %801 = vmatpush.msra.mxu0 0.0
        %802 = vmatpush.msra.mxu0 0.0
        %803 = vmatpush.msra.mxu0 0.0
        %804 = vmatpush.msra.mxu0 0.0
        %805 = vmatpush.msra.mxu0 0.0
        %806 = vmatpush.msra.mxu0 0.0
        %807 = vmatpush.msra.mxu0 0.0
        %808 = vmatpush.msra.mxu0 %v788
        %809 = vmatmul.f32.gmra.mxu0 %v791
        %v810 = vpop.f32.mrf.mxu0
        %v811 = vadd.f32 0.0, %v810
        %812 = vdwg.mxu0
        %814 = vrot.lane.b32.xlu0 %v655, 8
        %v815 = vpop.permute.xlu0 %814
        %818 = vrot.lane.b32.xlu0 %v733, 16
        %v819 = vpop.permute.xlu0 %818
        %822 = vrot.lane.b32.xlu0 %v811, 24
        %v823 = vpop.permute.xlu0 %822
        %v825 = vsel %vm506, %v576, %v815
        %vm826 = vcmask 130048
        %v827 = vsel %vm826, %v825, %v819
        %vm828 = vcmask 195584
        %v829 = vsel %vm828, %v827, %v823
        %v830 = vld [vmem:[%s4] sm:$0xff]
        %v831 = vld [vmem:[%s4 + $0x8] sm:$0xff]
        %v832 = vld [vmem:[%s4 + $0x10] sm:$0xff]
        %v833 = vld [vmem:[%s4 + $0x18] sm:$0xff]
        %v834 = vperm.slane %v438, 0
        %v836 = vsel %vm451, %v829, 0
        %838 = vmatpush.msra.mxu0 0.0
        %839 = vmatpush.msra.mxu0 0.0
        %840 = vmatpush.msra.mxu0 0.0
        %841 = vmatpush.msra.mxu0 0.0
        %842 = vmatpush.msra.mxu0 0.0
        %843 = vmatpush.msra.mxu0 0.0
        %844 = vmatpush.msra.mxu0 0.0
        %845 = vmatpush.msra.mxu0 0.0
        %846 = vmatpush.msra.mxu0 0.0
        %847 = vmatpush.msra.mxu0 0.0
        %848 = vmatpush.msra.mxu0 0.0
        %849 = vmatpush.msra.mxu0 0.0
        %850 = vmatpush.msra.mxu0 %v833
        %851 = vmatpush.msra.mxu0 %v832
        %852 = vmatpush.msra.mxu0 %v831
        %853 = vmatpush.msra.mxu0 %v830
        %854 = vmatmul.f32.gmra.mxu0 %v836
        %v855 = vpop.f32.mrf.mxu0
        %v856 = vadd.f32 %v834, %v855
        %857 = vdwg.mxu0
        %v858 = vadd.f32 %v434, %v856
        %v859 = vsel %vm451, %v858, 0.0
        %860 = vadd.xlane.f32.xlu0 %v859
        %v861 = vpop.xlane.xlu0 %860
        %v862 = vrcp.pop 32.0
        %v863 = vmul.f32 32.0, %v862
        %v864 = vsub.f32 1.0, %v863
        %v865 = vmul.f32 %v862, %v864
        %v866 = vadd.f32 %v862, %v865
        %vm867 = vweird.f32 %v862
        %v868 = vsel %vm867, %v862, %v866
        %v869 = vmul.f32 %v861, %v868
        %v870 = vsub.f32 %v858, %v869
        %v871 = vmul.f32 %v870, %v870
        %v872 = vsel %vm451, %v871, 0.0
        %873 = vadd.xlane.f32.xlu0 %v872
        %v874 = vpop.xlane.xlu0 %873
        %v875 = vmul.f32 %v874, %v868
        %v876 = vadd.f32 %v875, 1e-05
        %v877 = vrsqrt.pop %v876
        %v878 = vmul.f32 %v877, %v876
        %v879 = vmul.f32 %v878, %v877
        %v880 = vmul.f32 0.5, %v879
        %v881 = vsub.f32 1.5, %v880
        %v882 = vmul.f32 %v877, %v881
        %vm883 = vweird.f32 %v876
        %vm884 = vweird.f32 %v877
        %vm885 = vmor %vm883, %vm884
        %v886 = vsel %vm885, %v877, %v882
        %v887 = vmul.f32 %v870, %v886
        %v888 = vperm.slane %v439, 0
        %v889 = vmul.f32 %v887, %v888
        %v890 = vperm.slane %v440, 0
        %v891 = vadd.f32 %v889, %v890
        %v892 = vld [vmem:[#allocation7] sm:$0xff]
        %v893 = vld [vmem:[#allocation7 + $0x8] sm:$0xff]
        %v894 = vld [vmem:[#allocation7 + $0x10] sm:$0xff]
        %v895 = vld [vmem:[#allocation7 + $0x18] sm:$0xff]
        %v896 = vperm.slane %v445, 0
        %v898 = vsel %vm451, %v891, 0
        %900 = vmatpush.msra.mxu0 0.0
        %901 = vmatpush.msra.mxu0 0.0
        %902 = vmatpush.msra.mxu0 0.0
        %903 = vmatpush.msra.mxu0 0.0
        %904 = vmatpush.msra.mxu0 0.0
        %905 = vmatpush.msra.mxu0 0.0
        %906 = vmatpush.msra.mxu0 0.0
        %907 = vmatpush.msra.mxu0 0.0
        %908 = vmatpush.msra.mxu0 0.0
        %909 = vmatpush.msra.mxu0 0.0
        %910 = vmatpush.msra.mxu0 0.0
        %911 = vmatpush.msra.mxu0 0.0
        %912 = vmatpush.msra.mxu0 %v895
        %913 = vmatpush.msra.mxu0 %v894
        %914 = vmatpush.msra.mxu0 %v893
        %915 = vmatpush.msra.mxu0 %v892
        %916 = vmatmul.f32.gmra.mxu0 %v898
        %v917 = vpop.f32.mrf.mxu0
        %v918 = vadd.f32 %v896, %v917
        %919 = vdwg.mxu0
        %vm920 = vcmp.ge.f32.partialorder %v918, 0.0
        %v921 = vmul.f32 %v918, 0.01
        %v922 = vsel %vm920, %v918, %v921
        %v923 = vld [vmem:[%s6] sm:$0xff]
        %v924 = vld [vmem:[%s6 + $0x8] sm:$0xff]
        %v925 = vld [vmem:[%s6 + $0x10] sm:$0xff]
        %v926 = vld [vmem:[%s6 + $0x18] sm:$0xff]
        %v927 = vld [vmem:[%s6 + $0x20] sm:$0xff]
        %v928 = vld [vmem:[%s6 + $0x28] sm:$0xff]
        %v929 = vld [vmem:[%s6 + $0x30] sm:$0xff]
        %v930 = vld [vmem:[%s6 + $0x38] sm:$0xff]
        %v931 = vperm.slane %v441, 0
        %vm932 = vcmask 523264
        %v934 = vsel %vm932, %v922, 0
        %936 = vmatpush.msra.mxu0 0.0
        %937 = vmatpush.msra.mxu0 0.0
        %938 = vmatpush.msra.mxu0 0.0
        %939 = vmatpush.msra.mxu0 0.0
        %940 = vmatpush.msra.mxu0 0.0
        %941 = vmatpush.msra.mxu0 0.0
        %942 = vmatpush.msra.mxu0 0.0
        %943 = vmatpush.msra.mxu0 0.0
        %944 = vmatpush.msra.mxu0 %v930
        %945 = vmatpush.msra.mxu0 %v929
        %946 = vmatpush.msra.mxu0 %v928
        %947 = vmatpush.msra.mxu0 %v927
        %948 = vmatpush.msra.mxu0 %v926
        %949 = vmatpush.msra.mxu0 %v925
        %950 = vmatpush.msra.mxu0 %v924
        %951 = vmatpush.msra.mxu0 %v923
        %952 = vmatmul.f32.gmra.mxu0 %v934
        %v953 = vpop.f32.mrf.mxu0
        %v954 = vadd.f32 %v931, %v953
        %955 = vdwg.mxu0
        %v956 = vadd.f32 %v891, %v954
        %v957 = vsel %vm451, %v956, 0.0
        %958 = vadd.xlane.f32.xlu0 %v957
        %v959 = vpop.xlane.xlu0 %958
        %v960 = vmul.f32 %v959, %v868
        %v961 = vsub.f32 %v956, %v960
        %v962 = vmul.f32 %v961, %v961
        %v963 = vsel %vm451, %v962, 0.0
        %964 = vadd.xlane.f32.xlu0 %v963
        %v965 = vpop.xlane.xlu0 %964
        %v966 = vmul.f32 %v965, %v868
        %v967 = vadd.f32 %v966, 1e-05
        %v968 = vrsqrt.pop %v967
        %v969 = vmul.f32 %v968, %v967
        %v970 = vmul.f32 %v969, %v968
        %v971 = vmul.f32 0.5, %v970
        %v972 = vsub.f32 1.5, %v971
        %v973 = vmul.f32 %v968, %v972
        %vm974 = vweird.f32 %v967
        %vm975 = vweird.f32 %v968
        %vm976 = vmor %vm974, %vm975
        %v977 = vsel %vm976, %v968, %v973
        %v978 = vmul.f32 %v961, %v977
        %v979 = vperm.slane %v442, 0
        %v980 = vmul.f32 %v978, %v979
        %v981 = vperm.slane %v443, 0
        %v982 = vadd.f32 %v980, %v981
        %983 = vst.msk [vmem:[%s433] sm:$0xff] %vm451, %v982
        %s984 = sand.u32 %s237, 1
        %s985 = scalar_lea.sflag [#allocation4], %s984
        %s986 = sand.u32 %s237, 1
        %s987 = smul.addr %s986, 8
        %s988 = scalar_lea.vmem [#allocation11], %s987
        // Predicated region
        $region77: #{transformer_encoder_layer.1} parent=55 // pred_check
          %p989 = pneg %p247
        $region78: #{transformer_encoder_layer.1} parent=55 // pred_check_branch
          %991 = sbr.rel (%p989) target = $region80
        $region79: #{transformer_encoder_layer.1} parent=55 // pred_region
          %993 = vsyncadd %s985, 0
          %s994 = smul.addr %s30, 8
          %s995 = scalar_lea.hbm %s9, %s994
          %s997 = sshll.u32 %s988, 4
          %s998 = int_to_ptr.vmem [resolvable:$true] %s997
          %s999 = sshll.u32 %s995, 4
          %s1000 = int_to_ptr.hbm [resolvable:$true] %s999
          %1002 = dma.vmem_to_hbm [thread:$0]  %s998, 128, %s1000, %s985
        $region80: #{transformer_encoder_layer.1} parent=55 // pred_fallthru
          _
      $region56: #{transformer_encoder_layer.1} parent=5 // pred_fallthru
        _
      %p1003 = scmp.le.s32.totalorder 2, %s25
      // Predicated region
      $region81: #{transformer_encoder_layer.1} parent=5 // pred_check
        %p1004 = pneg %p1003
      $region82: #{transformer_encoder_layer.1} parent=5 // pred_check_branch
        %1006 = sbr.rel (%p1004) target = $region84
      $region83: #{transformer_encoder_layer.1} parent=5 // pred_region
        %s1007 = ssub.s32 %s25, 2
        // Predicated region
        $region85: #{transformer_encoder_layer.1} parent=83 // pred_check
          %p1008 = pneg %p253
        $region86: #{transformer_encoder_layer.1} parent=83 // pred_check_branch
          %1010 = sbr.rel (%p1008) target = $region88
        $region87: #{transformer_encoder_layer.1} parent=83 // pred_region
          %s1011 = sand.u32 %s238, 1
          %s1012 = scalar_lea.sflag [#allocation4], %s1011
          %s1013 = sand.u32 %s238, 1
          %s1014 = smul.addr %s1013, 8
          %s1015 = scalar_lea.vmem [#allocation11], %s1014
          %1017 = dma.done %s1012, 128
        $region88: #{transformer_encoder_layer.1} parent=83 // pred_fallthru
          _
      $region84: #{transformer_encoder_layer.1} parent=5 // pred_fallthru
        _
    $region6: #{transformer_encoder_layer.1} parent=1 // loop_footer
      %s29 = sadd.s32 1, %s25
    $region7: #{transformer_encoder_layer.1} parent=1 // loop_footer_branch
      %24 = sbr.rel target = $region3
    $region8: #{transformer_encoder_layer.1} parent=1 // loop_exit
      _
    %1018 = vsyncpa [#allocation3], 1
    %s1019 = scalar_lea.sflag [#allocation3], 1
    %1020 = vsyncpa %s1019, 1
    %1021 = vsyncpa [#allocation6], 1
    %s1022 = scalar_lea.sflag [#allocation6], 1
    %1023 = vsyncpa %s1022, 1
    %1024 = vsyncpa [#allocation9], 1
    %1025 = vsyncpa [#allocation4], 1
    %s1026 = scalar_lea.sflag [#allocation4], 1
    %1027 = vsyncpa %s1026, 1

</llo_original>
